<compile_context>
chip_gen: v7x
topology: tpu7x:2x2x1
jax: 0.10.0
libtpu: 0.0.40
codegen_flags: <defaults>
</compile_context>

<pallas_src>
import functools

import jax
import jax.numpy as jnp
from jax import lax
from jax.experimental import pallas as pl
from jax.experimental.pallas import tpu as pltpu

_LANE = 128
_ACC_LANES = 512   # accumulator lane width (wider than 128 to shorten the fold chain)
_UNROLL = 8        # bounded unroll for the group-fold loop


def _round_up(x, m):
    return (x + m - 1) // m * m


def _channel_attention_kernel(x_ref, w1_ref, w2_ref, out_ref,
                              sum_acc, max_acc, *,
                              hw, t_hw, grp, rem, unroll):
    # x_ref:   (1, C, t_hw)  input tile (last tile may be partial; OOB lanes are never read)
    # w1_ref:  (C, Cr)       conv1 1x1 weight, transposed to (in, out); VMEM resident
    # w2_ref:  (Cr, C)       conv2 1x1 weight, transposed to (in, out); VMEM resident
    # out_ref: (1, 1, C)     sigmoid(fc(avg) + fc(max)) for this batch element
    # sum_acc / max_acc: (1, C, grp) f32 running accumulators (VMEM scratch)
    k = pl.program_id(1)
    nk = pl.num_programs(1)

    @pl.when(k == 0)
    def _():
        sum_acc[...] = jnp.zeros_like(sum_acc)
        max_acc[...] = jnp.full_like(max_acc, -jnp.inf)

    def fold(lo, width):
        # Slice straight from the ref (no full-tile f32 copy); accumulate into the
        # VMEM scratch so only one (C, width) slice is live at a time.
        xg = x_ref[:, :, pl.ds(lo, width)].astype(jnp.float32)          # (1, C, width)
        sum_acc[:, :, :width] = sum_acc[:, :, :width] + xg
        max_acc[:, :, :width] = jnp.maximum(max_acc[:, :, :width], xg)

    def fold_groups(g0, g1):
        count = g1 - g0
        if count <= 0:
            return
        if count <= unroll:
            for g in range(g0, g1):                  # fully static slices
                fold(g * grp, grp)
        else:
            def body(g, carry):
                fold(pl.multiple_of(g * grp, grp), grp)
                return carry
            lax.fori_loop(g0, g1, body, None, unroll=unroll)

    n_groups = t_hw // grp                 # full-width groups per tile
    tile_tail = t_hw - n_groups * grp      # nonzero only in the single-tile (t_hw == HW) case
    last_full = min(n_groups, rem // grp)  # groups fully valid on the LAST tile
    last_tail = rem - last_full * grp      # valid lanes of the straddling group on the LAST tile

    # Groups that are fully valid on every tile: no masking, no branch.
    fold_groups(0, last_full)

    if n_groups > last_full:
        # These groups are full on every tile but the last.
        @pl.when(k < nk - 1)
        def _():
            fold_groups(last_full, n_groups)

        # On the last tile only the leading `last_tail` lanes of the straddling
        # group are valid: read exactly that static slice (no mask needed).
        if last_tail > 0:
            @pl.when(k == nk - 1)
            def _():
                fold(last_full * grp, last_tail)
    elif tile_tail > 0:
        # Single-tile case where HW is not a multiple of grp.
        fold(n_groups * grp, tile_tail)

    @pl.when(k == nk - 1)
    def _():
        # Single final lane reduce, then the fused FC for both pooled branches.
        avg = jnp.sum(sum_acc[...], axis=-1) * jnp.float32(1.0 / hw)     # (1, C)
        mx = jnp.max(max_acc[...], axis=-1)                              # (1, C)
        both = jnp.concatenate([avg, mx], axis=0)                        # (2, C)
        w1 = w1_ref[...].astype(jnp.float32)                             # (C, Cr)
        w2 = w2_ref[...].astype(jnp.float32)                             # (Cr, C)
        # Tiny FC done exactly in f32 on the VPU (runs once per batch element).
        h = jnp.maximum(jnp.sum(both[:, :, None] * w1[None, :, :], axis=1), 0.0)  # (2, Cr)
        y = jnp.sum(h[:, :, None] * w2[None, :, :], axis=1)              # (2, C)
        out = jax.nn.sigmoid(y[0:1, :] + y[1:2, :])                      # (1, C)
        out_ref[...] = out[:, None, :].astype(out_ref.dtype)             # (1, 1, C)


def channel_attention(x, w1, w2, *, max_tile_bytes=4 * 1024 * 1024,
                      acc_lanes=_ACC_LANES, buffers=2):
    """x: (B, C, H, W) NCHW.  w1: (Cr, C) conv1 weight.  w2: (C, Cr) conv2 weight.

    Returns sigmoid(fc(avg_pool(x)) + fc(max_pool(x))) with shape (B, C, 1, 1).
    """
    B, C, H, W = x.shape
    Cr = w1.shape[0]
    HW = H * W
    itemsize = x.dtype.itemsize

    x_flat = x.reshape(B, C, HW)   # metadata-only reshape (contiguous trailing dims)

    # ---- HW tile selection: no wrapper padding; ragged tail handled in-kernel.
    budget_lanes = max(_LANE, (max_tile_bytes // max(1, C * itemsize)) // _LANE * _LANE)
    if HW <= budget_lanes:
        t_hw = HW                                            # single tile == full dim
        grp = min(acc_lanes, _round_up(HW, _LANE))
    else:
        grp = min(acc_lanes, budget_lanes)                   # multiple of 128
        t_hw = (budget_lanes // grp) * grp                   # multiple of grp (and 128)
    k_tiles = pl.cdiv(HW, t_hw)
    rem = HW - (k_tiles - 1) * t_hw                          # valid lanes on the last tile

    # TODO(synk): for B == 1 on v7x (2 TensorCores) split the HW reduction across
    # cores with per-core partial accumulators + a combine step; with B >= 2 the
    # "parallel" batch axis already load-balances the cores.

    w1_t = w1.T   # (C, Cr)
    w2_t = w2.T   # (Cr, C)

    kernel = functools.partial(
        _channel_attention_kernel,
        hw=HW, t_hw=t_hw, grp=grp, rem=rem, unroll=_UNROLL)

    # Explicit VMEM budget: buffers x tile + weights + accumulators + headroom.
    nbuf = max(2, buffers)
    tile_bytes = C * t_hw * itemsize
    vmem_limit = (nbuf * tile_bytes
                  + 4 * C * Cr * w1.dtype.itemsize
                  + 2 * C * grp * 4
                  + 2 * C * itemsize
                  + (2 << 20))
    vmem_limit = int(min(max(vmem_limit, 8 << 20), 64 << 20))

    x_spec_kwargs = {}
    if buffers != 2 and hasattr(pl, "Buffered"):
        # Deeper pipelining (e.g. 3 on v7x) to hide the fixed per-grid-step overhead.
        x_spec_kwargs["pipeline_mode"] = pl.Buffered(buffers)
    x_spec = pl.BlockSpec((1, C, t_hw), lambda b, k: (b, 0, k), **x_spec_kwargs)

    cost = pl.CostEstimate(
        flops=int(2 * B * C * HW + 8 * B * C * Cr),
        transcendentals=int(B * C),
        bytes_accessed=int(B * C * HW * itemsize
                           + 2 * C * Cr * w1.dtype.itemsize
                           + B * C * itemsize),
    )

    out = pl.pallas_call(
        kernel,
        out_shape=jax.ShapeDtypeStruct((B, 1, C), x.dtype),
        grid_spec=pltpu.PrefetchScalarGridSpec(
            num_scalar_prefetch=0,
            grid=(B, k_tiles),
            in_specs=[
                x_spec,
                pl.BlockSpec((C, Cr), lambda b, k: (0, 0)),   # VMEM-resident weights
                pl.BlockSpec((Cr, C), lambda b, k: (0, 0)),
            ],
            out_specs=pl.BlockSpec((1, 1, C), lambda b, k: (b, 0, 0)),
            scratch_shapes=[
                pltpu.VMEM((1, C, grp), jnp.float32),   # running sum
                pltpu.VMEM((1, C, grp), jnp.float32),   # running max
            ],
        ),
        compiler_params=pltpu.CompilerParams(
            dimension_semantics=("parallel", "arbitrary"),
            vmem_limit_bytes=vmem_limit,
        ),
        cost_estimate=cost,
    )(x_flat, w1_t, w2_t)

    return out.reshape(B, C, 1, 1)


def channel_attention_ref(x, w1, w2):
    """Pure-JAX reference mirroring the PyTorch forward (full f32 precision)."""
    avg = jnp.mean(x, axis=(2, 3))  # (B, C)
    mx = jnp.max(x, axis=(2, 3))    # (B, C)
    hp = jax.lax.Precision.HIGHEST

    def fc(v):
        h = jnp.maximum(jnp.dot(v, w1.T, precision=hp), 0.0)
        return jnp.dot(h, w2.T, precision=hp)

    return jax.nn.sigmoid(fc(avg) + fc(mx))[:, :, None, None]


def _check(x, w1, w2, **kw):
    out = jax.block_until_ready(channel_attention(x, w1, w2, **kw))
    ref = channel_attention_ref(x, w1, w2)
    assert out.shape == ref.shape, (out.shape, ref.shape)
    err = jnp.max(jnp.abs(out - ref))
    assert jnp.allclose(out, ref, atol=1e-5, rtol=1e-5), f"max abs err {err}"


if __name__ == "__main__":
    # The module hardcodes `in_planes // 16` in fc, so channels must be >= 16.
    B, C, H, W = 2, 32, 16, 16
    Cr = C // 16  # = 2

    key = jax.random.PRNGKey(0)
    kx, k1, k2 = jax.random.split(key, 3)

    x = jax.random.normal(kx, (B, C, H, W), dtype=jnp.float32)
    # Conv2d 1x1 (bias=False) weights: conv1 (Cr, C, 1, 1) -> (Cr, C); conv2 (C, Cr, 1, 1) -> (C, Cr).
    w1 = jax.random.normal(k1, (Cr, C), dtype=jnp.float32) * 0.1
    w2 = jax.random.normal(k2, (C, Cr), dtype=jnp.float32) * 0.1

    # 1) single-tile path (HW = 256 -> one tile, 256-lane accumulators)
    _check(x, w1, w2)

    # 2) multi-tile exact path (t_hw = 128 -> 2 HW tiles)
    _check(x, w1, w2, max_tile_bytes=16 * 1024)

    # 3) single-tile ragged path (HW = 100 < 128: partial-lane fold, no padding)
    x_small = jax.random.normal(kx, (B, C, 10, 10), dtype=jnp.float32)
    _check(x_small, w1, w2)

    # 4) multi-tile ragged path (HW = 169, t_hw = 128 -> last tile has 41 valid lanes)
    x_ragged = jax.random.normal(kx, (B, C, 13, 13), dtype=jnp.float32)
    _check(x_ragged, w1, w2, max_tile_bytes=16 * 1024)

    # 5) many-group path (HW = 9216 -> 18 x 512-lane groups -> bounded-unroll fori_loop)
    x_big = jax.random.normal(kx, (B, C, 96, 96), dtype=jnp.float32)
    _check(x_big, w1, w2)

    print("KERNEL_OK")
</pallas_src>

<mosaic_0001>
module attributes {stable_mosaic.version = 11 : i64} {
  func.func @_channel_attention_kernel(%arg0: i32, %arg1: i32, %arg2: memref<1x32x256xf32, #tpu.memory_space<vmem>>, %arg3: memref<32x2xf32, #tpu.memory_space<vmem>>, %arg4: memref<2x32xf32, #tpu.memory_space<vmem>>, %arg5: memref<1x1x32xf32, #tpu.memory_space<vmem>>, %arg6: memref<1x32x256xf32, #tpu.memory_space<vmem>>, %arg7: memref<1x32x256xf32, #tpu.memory_space<vmem>>) attributes {dimension_semantics = [#tpu.dimension_semantics<parallel>, #tpu.dimension_semantics<arbitrary>], iteration_bounds = array<i64: 2, 1>, scalar_prefetch = 0 : i64, scratch_operands = 2 : i64, tpu.core_type = #tpu.core_type<tc>, window_params = [{transform_indices = @transform_0, window_bounds = array<i64: 1, 32, 256>}, {pipeline_mode = #tpu.pipeline_mode<synchronous>, transform_indices = @transform_1, window_bounds = array<i64: 32, 2>}, {pipeline_mode = #tpu.pipeline_mode<synchronous>, transform_indices = @transform_2, window_bounds = array<i64: 2, 32>}, {transform_indices = @transform_3, window_bounds = array<i64: 1, 1, 32>}]} {
    %c0_i32 = arith.constant 0 : i32
    %0 = arith.cmpi eq, %arg1, %c0_i32 : i32
    %1 = arith.extui %0 : i1 to i32
    %c0_i32_0 = arith.constant 0 : i32
    %2 = arith.cmpi ne, %1, %c0_i32_0 : i32
    scf.if %2 {
      %cst = arith.constant 0.000000e+00 : f32
      %13 = vector.broadcast %cst : f32 to vector<1x32x256xf32>
      %c0_17 = arith.constant 0 : index
      %c0_18 = arith.constant 0 : index
      %c0_19 = arith.constant 0 : index
      %14 = vector.load %arg6[%c0_17, %c0_18, %c0_19] : memref<1x32x256xf32, #tpu.memory_space<vmem>>, vector<1x32x256xf32>
      tpu.vector_store %arg6[%c0_17, %c0_18, %c0_19], %13 {strides = array<i32>} : memref<1x32x256xf32, #tpu.memory_space<vmem>>, vector<1x32x256xf32>,
      %cst_20 = arith.constant 0xFF800000 : f32
      %15 = vector.broadcast %cst_20 : f32 to vector<1x32x256xf32>
      %c0_21 = arith.constant 0 : index
      %c0_22 = arith.constant 0 : index
      %c0_23 = arith.constant 0 : index
      %16 = vector.load %arg7[%c0_21, %c0_22, %c0_23] : memref<1x32x256xf32, #tpu.memory_space<vmem>>, vector<1x32x256xf32>
      tpu.vector_store %arg7[%c0_21, %c0_22, %c0_23], %15 {strides = array<i32>} : memref<1x32x256xf32, #tpu.memory_space<vmem>>, vector<1x32x256xf32>,
    } else {
    }
    %c0 = arith.constant 0 : index
    %c0_1 = arith.constant 0 : index
    %c0_2 = arith.constant 0 : index
    %3 = vector.load %arg2[%c0, %c0_1, %c0_2] : memref<1x32x256xf32, #tpu.memory_space<vmem>>, vector<1x32x256xf32>
    %c0_3 = arith.constant 0 : index
    %c0_4 = arith.constant 0 : index
    %c0_5 = arith.constant 0 : index
    %4 = vector.load %arg6[%c0_3, %c0_4, %c0_5] : memref<1x32x256xf32, #tpu.memory_space<vmem>>, vector<1x32x256xf32>
    %5 = arith.addf %4, %3 : vector<1x32x256xf32>
    %c0_6 = arith.constant 0 : index
    %c0_7 = arith.constant 0 : index
    %c0_8 = arith.constant 0 : index
    %6 = vector.load %arg6[%c0_6, %c0_7, %c0_8] : memref<1x32x256xf32, #tpu.memory_space<vmem>>, vector<1x32x256xf32>
    tpu.vector_store %arg6[%c0_6, %c0_7, %c0_8], %5 {strides = array<i32>} : memref<1x32x256xf32, #tpu.memory_space<vmem>>, vector<1x32x256xf32>,
    %c0_9 = arith.constant 0 : index
    %c0_10 = arith.constant 0 : index
    %c0_11 = arith.constant 0 : index
    %7 = vector.load %arg7[%c0_9, %c0_10, %c0_11] : memref<1x32x256xf32, #tpu.memory_space<vmem>>, vector<1x32x256xf32>
    %8 = arith.maximumf %7, %3 : vector<1x32x256xf32>
    %c0_12 = arith.constant 0 : index
    %c0_13 = arith.constant 0 : index
    %c0_14 = arith.constant 0 : index
    %9 = vector.load %arg7[%c0_12, %c0_13, %c0_14] : memref<1x32x256xf32, #tpu.memory_space<vmem>>, vector<1x32x256xf32>
    tpu.vector_store %arg7[%c0_12, %c0_13, %c0_14], %8 {strides = array<i32>} : memref<1x32x256xf32, #tpu.memory_space<vmem>>, vector<1x32x256xf32>,
    %c0_i32_15 = arith.constant 0 : i32
    %10 = arith.cmpi eq, %arg1, %c0_i32_15 : i32
    %11 = arith.extui %10 : i1 to i32
    %c0_i32_16 = arith.constant 0 : i32
    %12 = arith.cmpi ne, %11, %c0_i32_16 : i32
    scf.if %12 {
      %c0_17 = arith.constant 0 : index
      %c0_18 = arith.constant 0 : index
      %c0_19 = arith.constant 0 : index
      %13 = vector.load %arg6[%c0_17, %c0_18, %c0_19] : memref<1x32x256xf32, #tpu.memory_space<vmem>>, vector<1x32x256xf32>
      %cst = arith.constant dense<0.000000e+00> : vector<1x32xf32>
      %14 = vector.multi_reduction <add>, %13, %cst [2] : vector<1x32x256xf32> to vector<1x32xf32>
      %cst_20 = arith.constant 3.906250e-03 : f32
      %15 = vector.broadcast %cst_20 : f32 to vector<1x32xf32>
      %16 = arith.mulf %14, %15 : vector<1x32xf32>
      %c0_21 = arith.constant 0 : index
      %c0_22 = arith.constant 0 : index
      %c0_23 = arith.constant 0 : index
      %17 = vector.load %arg7[%c0_21, %c0_22, %c0_23] : memref<1x32x256xf32, #tpu.memory_space<vmem>>, vector<1x32x256xf32>
      %cst_24 = arith.constant dense<0xFF800000> : vector<1x32xf32>
      %18 = vector.multi_reduction <maximumf>, %17, %cst_24 [2] : vector<1x32x256xf32> to vector<1x32xf32>
      %19 = tpu.concatenate %16, %18 in 0 : vector<1x32xf32>, vector<1x32xf32> -> vector<2x32xf32>
      %c0_25 = arith.constant 0 : index
      %c0_26 = arith.constant 0 : index
      %20 = vector.load %arg3[%c0_25, %c0_26] : memref<32x2xf32, #tpu.memory_space<vmem>>, vector<32x2xf32>
      %c0_27 = arith.constant 0 : index
      %c0_28 = arith.constant 0 : index
      %21 = vector.load %arg4[%c0_27, %c0_28] : memref<2x32xf32, #tpu.memory_space<vmem>>, vector<2x32xf32>
      %22 = vector.shape_cast %19 : vector<2x32xf32> to vector<2x32x1xf32>
      %23 = vector.shape_cast %20 : vector<32x2xf32> to vector<1x32x2xf32>
      %24 = vector.broadcast %22 : vector<2x32x1xf32> to vector<2x32x2xf32>
      %25 = vector.broadcast %23 : vector<1x32x2xf32> to vector<2x32x2xf32>
      %26 = arith.mulf %24, %25 : vector<2x32x2xf32>
      %cst_29 = arith.constant dense<0.000000e+00> : vector<2x2xf32>
      %27 = vector.multi_reduction <add>, %26, %cst_29 [1] : vector<2x32x2xf32> to vector<2x2xf32>
      %cst_30 = arith.constant 0.000000e+00 : f32
      %28 = vector.broadcast %cst_30 : f32 to vector<2x2xf32>
      %29 = arith.maximumf %27, %28 : vector<2x2xf32>
      %30 = vector.shape_cast %29 : vector<2x2xf32> to vector<2x2x1xf32>
      %31 = vector.shape_cast %21 : vector<2x32xf32> to vector<1x2x32xf32>
      %32 = vector.broadcast %30 : vector<2x2x1xf32> to vector<2x2x32xf32>
      %33 = vector.broadcast %31 : vector<1x2x32xf32> to vector<2x2x32xf32>
      %34 = arith.mulf %32, %33 : vector<2x2x32xf32>
      %cst_31 = arith.constant dense<0.000000e+00> : vector<2x32xf32>
      %35 = vector.multi_reduction <add>, %34, %cst_31 [1] : vector<2x2x32xf32> to vector<2x32xf32>
      %36 = vector.extract_strided_slice %35 {offsets = [0, 0], sizes = [1, 32], strides = [1, 1]} : vector<2x32xf32> to vector<1x32xf32>
      %37 = vector.extract_strided_slice %35 {offsets = [1, 0], sizes = [1, 32], strides = [1, 1]} : vector<2x32xf32> to vector<1x32xf32>
      %38 = arith.addf %36, %37 : vector<1x32xf32>
      %39 = arith.negf %38 : vector<1x32xf32>
      %40 = math.exp %39 : vector<1x32xf32>
      %cst_32 = arith.constant 1.000000e+00 : f32
      %41 = vector.broadcast %cst_32 : f32 to vector<1x32xf32>
      %42 = arith.addf %41, %40 : vector<1x32xf32>
      %43 = arith.divf %41, %42 : vector<1x32xf32>
      %44 = vector.shape_cast %43 : vector<1x32xf32> to vector<1x1x32xf32>
      %c0_33 = arith.constant 0 : index
      %c0_34 = arith.constant 0 : index
      %c0_35 = arith.constant 0 : index
      %45 = vector.load %arg5[%c0_33, %c0_34, %c0_35] : memref<1x1x32xf32, #tpu.memory_space<vmem>>, vector<1x1x32xf32>
      tpu.vector_store %arg5[%c0_33, %c0_34, %c0_35], %44 {strides = array<i32>} : memref<1x1x32xf32, #tpu.memory_space<vmem>>, vector<1x1x32xf32>,
    } else {
    }
    return
  }
  func.func @transform_0(%arg0: i32, %arg1: i32) -> (i32, i32, i32) {
    %c0_i32 = arith.constant 0 : i32
    %c0_i32_0 = arith.constant 0 : i32
    return %arg0, %c0_i32, %arg1 : i32, i32, i32
  }
  func.func @transform_1(%arg0: i32, %arg1: i32) -> (i32, i32) {
    %c0_i32 = arith.constant 0 : i32
    %c0_i32_0 = arith.constant 0 : i32
    %c0_i32_1 = arith.constant 0 : i32
    return %c0_i32, %c0_i32_0 : i32, i32
  }
  func.func @transform_2(%arg0: i32, %arg1: i32) -> (i32, i32) {
    %c0_i32 = arith.constant 0 : i32
    %c0_i32_0 = arith.constant 0 : i32
    %c0_i32_1 = arith.constant 0 : i32
    return %c0_i32, %c0_i32_0 : i32, i32
  }
  func.func @transform_3(%arg0: i32, %arg1: i32) -> (i32, i32, i32) {
    %c0_i32 = arith.constant 0 : i32
    %c0_i32_0 = arith.constant 0 : i32
    %c0_i32_1 = arith.constant 0 : i32
    return %arg0, %c0_i32, %c0_i32_0 : i32, i32, i32
  }
}

</mosaic_0001>

<llo_original>
// kernel: tpu_custom_call.1
$region0: #{tpu_custom_call.1}
  #allocation0 [shape = 'u32[]', space=smem, size = 0x4, offset = 0x4, fixed_abs, tag = 'smem constant byte address 0x4 - core index']
  #allocation1 [shape = 'u32[144,128]{1,0:T(1,128)}', space=vmem, size = 0x12000, scoped, tag = 'internal scratch']
  #allocation2 [shape = 'f32[1,32,256]{2,1,0:T(8,128)}', space=vmem, size = 0x8000, scoped, tag = 'scratch operand']
  #allocation3 [shape = 'f32[1,32,256]{2,1,0:T(8,128)}', space=vmem, size = 0x8000, scoped, tag = 'scratch operand']
  %s0 = inlined_call_operand.hbm [shape: f32[2,32,256], index: 0, kind: input, shape index: {}]
  %s1 = inlined_call_operand.vmem [shape: f32[32,2], index: 1, kind: input, shape index: {}]
  %s2 = inlined_call_operand.vmem [shape: f32[2,32], index: 2, kind: input, shape index: {}]
  %s3 = inlined_call_operand.hbm [shape: f32[2,1,32], index: 3, kind: output, shape index: {}]
  %s4 = sld [smem:[#allocation0]]
  $region57: #{tpu_custom_call.1} parent=0
    _
  %s6 = ssub.s32 1, %s4
  %s7 = scalar_select 0, %s6, %s4
  $region1: #{tpu_custom_call.1} parent=0
    #allocation4 [shape = 'u8[65536]{0}', space=vmem, size = 0x10000, scoped, tag = 'input window, operand 0']
    #allocation5 [shape = 's32[2]{0}', space=sflag, size = 0x8, scoped, tag = 'scoped memory for tpu_custom_call.1']
    #allocation6 [shape = 's32[2]{0}', space=sflag, size = 0x8, scoped, tag = 'scoped memory for tpu_custom_call.1']
    #allocation7 [shape = 'u8[1024]{0}', space=vmem, size = 0x400, scoped, tag = 'output window, operand 0']
    %8 = vsyncpa [#allocation5], 0
    %s9 = scalar_lea.sflag [#allocation5], 1
    %10 = vsyncpa %s9, 0
    %11 = vsyncpa [#allocation6], 0
    %s12 = scalar_lea.sflag [#allocation6], 1
    %13 = vsyncpa %s12, 0
    loop: start=0, step=1, limit=4
    $region2: #{tpu_custom_call.1} parent=1 // loop_pre_header
      _
    $region3: #{tpu_custom_call.1} parent=1 // loop_header
      %s15 = sphi 0, %s19
      %p16 = scmp.ge.s32.totalorder %s15, 4
      %s22 = sphi 0, %s34
      %s23 = sphi 0, %s30
      %s24 = sphi 0, %s22
      %s25 = sphi 0, %s23
      %s26 = sphi 0, %s24
      %s27 = sphi 0, %s25
      %s39 = sphi 0, %s41
      %s42 = sphi 0, %s39
      %s43 = sphi 0, %s42
      %s59 = sphi 0, %s43
      %s63 = sphi 0, %s63
      %s65 = sphi 0, %s63
      %s66 = sphi 0, %s65
      %s80 = sphi 0, %s66
      %s84 = sphi 0, %s84
      %s86 = sphi 0, %s84
      %s87 = sphi 0, %s86
      %s101 = sphi 0, %s87
      %s107 = sphi 0, %s109
      %s110 = sphi 0, %s107
      %s111 = sphi 0, %s110
      %s127 = sphi 0, %s111
    $region4: #{tpu_custom_call.1} parent=1 // loop_header_branch
      %18 = sbr.rel (%p16) target = $region8
    $region5: #{tpu_custom_call.1} parent=1 // loop_body
      %s20 = ssub.s32 %s15, 1
      %s21 = ssub.s32 %s15, 2
      %s28 = sadd.s32 1, %s23
      %p29 = scmp.ge.s32.totalorder %s28, 1
      %s30 = scalar_select %p29, 0, %s28
      %s31 = sadd.s32 1, %s22
      %s32 = scalar_select %p29, %s31, %s22
      %p33 = scmp.ge.s32.totalorder %s32, 2
      %s34 = scalar_select %p33, 0, %s32
      %s35 = ssub.s32 %s22, %s34
      %s36 = ssub.s32 %s23, %s30
      %s37 = sor.u32 %s35, %s36
      %p38 = scmp.eq.s32.totalorder %s37, 0
      %s40 = sadd.s32 %s39, 1
      %s41 = scalar_select %p38, %s39, %s40
      %p44 = pneg %p38
      %p45 = scmp.eq.s32.totalorder %s15, 1
      %p46 = por %p44, %p45
      %p47 = scmp.ne.s32.totalorder %s39, %s42
      %p48 = scmp.eq.s32.totalorder %s15, 0
      %p49 = por %p47, %p48
      %p50 = scmp.ne.s32.totalorder %s39, %s42
      %p51 = scmp.eq.s32.totalorder %s20, 1
      %p52 = por %p50, %p51
      %p53 = scmp.ne.s32.totalorder %s42, %s43
      %p54 = scmp.eq.s32.totalorder %s20, 0
      %p55 = por %p53, %p54
      %p56 = scmp.ne.s32.totalorder %s42, %s43
      %p57 = scmp.eq.s32.totalorder %s21, 1
      %p58 = por %p56, %p57
      %p60 = scmp.ne.s32.totalorder %s43, %s59
      %p61 = scmp.eq.s32.totalorder %s21, 0
      %p62 = por %p60, %p61
      %s64 = sadd.s32 %s63, 1
      %p67 = scmp.eq.s32.totalorder %s15, 1
      %p68 = scmp.ne.s32.totalorder %s63, %s65
      %p69 = scmp.eq.s32.totalorder %s15, 0
      %p70 = por %p68, %p69
      %p71 = scmp.ne.s32.totalorder %s63, %s65
      %p72 = scmp.eq.s32.totalorder %s20, 1
      %p73 = por %p71, %p72
      %p74 = scmp.ne.s32.totalorder %s65, %s66
      %p75 = scmp.eq.s32.totalorder %s20, 0
      %p76 = por %p74, %p75
      %p77 = scmp.ne.s32.totalorder %s65, %s66
      %p78 = scmp.eq.s32.totalorder %s21, 1
      %p79 = por %p77, %p78
      %p81 = scmp.ne.s32.totalorder %s66, %s80
      %p82 = scmp.eq.s32.totalorder %s21, 0
      %p83 = por %p81, %p82
      %s85 = sadd.s32 %s84, 1
      %p88 = scmp.eq.s32.totalorder %s15, 1
      %p89 = scmp.ne.s32.totalorder %s84, %s86
      %p90 = scmp.eq.s32.totalorder %s15, 0
      %p91 = por %p89, %p90
      %p92 = scmp.ne.s32.totalorder %s84, %s86
      %p93 = scmp.eq.s32.totalorder %s20, 1
      %p94 = por %p92, %p93
      %p95 = scmp.ne.s32.totalorder %s86, %s87
      %p96 = scmp.eq.s32.totalorder %s20, 0
      %p97 = por %p95, %p96
      %p98 = scmp.ne.s32.totalorder %s86, %s87
      %p99 = scmp.eq.s32.totalorder %s21, 1
      %p100 = por %p98, %p99
      %p102 = scmp.ne.s32.totalorder %s87, %s101
      %p103 = scmp.eq.s32.totalorder %s21, 0
      %p104 = por %p102, %p103
      %s105 = ssub.s32 %s22, %s34
      %p106 = scmp.eq.s32.totalorder %s105, 0
      %s108 = sadd.s32 %s107, 1
      %s109 = scalar_select %p106, %s107, %s108
      %p112 = pneg %p106
      %p113 = scmp.eq.s32.totalorder %s15, 1
      %p114 = por %p112, %p113
      %p115 = scmp.ne.s32.totalorder %s107, %s110
      %p116 = scmp.eq.s32.totalorder %s15, 0
      %p117 = por %p115, %p116
      %p118 = scmp.ne.s32.totalorder %s107, %s110
      %p119 = scmp.eq.s32.totalorder %s20, 1
      %p120 = por %p118, %p119
      %p121 = scmp.ne.s32.totalorder %s110, %s111
      %p122 = scmp.eq.s32.totalorder %s20, 0
      %p123 = por %p121, %p122
      %p124 = scmp.ne.s32.totalorder %s110, %s111
      %p125 = scmp.eq.s32.totalorder %s21, 1
      %p126 = por %p124, %p125
      %p128 = scmp.ne.s32.totalorder %s111, %s127
      %p129 = scmp.eq.s32.totalorder %s21, 0
      %p130 = por %p128, %p129
      %p131 = scmp.le.s32.totalorder 1, %s15
      %p132 = scmp.lt.s32.totalorder %s15, 3
      %p133 = pnand %p131, %p132
      %p134 = pneg %p133
      // Predicated region
      $region9: #{tpu_custom_call.1} parent=5 // pred_check
        _
      $region10: #{tpu_custom_call.1} parent=5 // pred_check_branch
        %136 = sbr.rel (%p133) target = $region12
      $region11: #{tpu_custom_call.1} parent=5 // pred_region
        %s137 = ssub.s32 %s15, 1
        // Predicated region
        $region13: #{tpu_custom_call.1} parent=11 // pred_check
          %p138 = pneg %p76
        $region14: #{tpu_custom_call.1} parent=11 // pred_check_branch
          %140 = sbr.rel (%p138) target = $region16
        $region15: #{tpu_custom_call.1} parent=11 // pred_region
          _
        $region16: #{tpu_custom_call.1} parent=11 // pred_fallthru
          _
        // Predicated region
        $region17: #{tpu_custom_call.1} parent=11 // pred_check
          %p141 = pneg %p97
        $region18: #{tpu_custom_call.1} parent=11 // pred_check_branch
          %143 = sbr.rel (%p141) target = $region20
        $region19: #{tpu_custom_call.1} parent=11 // pred_region
          _
        $region20: #{tpu_custom_call.1} parent=11 // pred_fallthru
          _
      $region12: #{tpu_custom_call.1} parent=5 // pred_fallthru
        _
      %p144 = scmp.lt.s32.totalorder %s15, 2
      // Predicated region
      $region21: #{tpu_custom_call.1} parent=5 // pred_check
        %p145 = pneg %p144
      $region22: #{tpu_custom_call.1} parent=5 // pred_check_branch
        %147 = sbr.rel (%p145) target = $region24
      $region23: #{tpu_custom_call.1} parent=5 // pred_region
        // Predicated region
        $region25: #{tpu_custom_call.1} parent=23 // pred_check
          %p148 = pneg %p49
        $region26: #{tpu_custom_call.1} parent=23 // pred_check_branch
          %150 = sbr.rel (%p148) target = $region28
        $region27: #{tpu_custom_call.1} parent=23 // pred_region
          %s151 = sand.u32 %s39, 1
          %s152 = scalar_lea.sflag [#allocation5], %s151
          %s153 = sand.u32 %s39, 1
          %s154 = smul.addr %s153, 64
          %s155 = scalar_lea.vmem [#allocation4], %s154
          %s156 = smul.u32 2, %s23
          %s158 = ssub.s32 1024, 1024
          %159 = vsyncadd %s152, %s158
          %s160 = smul.addr %s22, 8
          %s161 = sadd.s32 %s156, %s160
          %s162 = smul.addr %s161, 128
          %s163 = scalar_lea.hbm %s0, %s162
          %s164 = sshll.u32 %s155, 4
          %s165 = int_to_ptr.vmem [resolvable:$true] %s164
          %170 = dma.hbm_to_vmem [thread:$0]  %s163, 1024, %s165, %s152, 256, 256, 16
        $region28: #{tpu_custom_call.1} parent=23 // pred_fallthru
          _
      $region24: #{tpu_custom_call.1} parent=5 // pred_fallthru
        _
      %p171 = scmp.le.s32.totalorder 1, %s15
      %p172 = scmp.lt.s32.totalorder %s15, 3
      %p173 = pnand %p171, %p172
      %p174 = pneg %p173
      // Predicated region
      $region29: #{tpu_custom_call.1} parent=5 // pred_check
        _
      $region30: #{tpu_custom_call.1} parent=5 // pred_check_branch
        %176 = sbr.rel (%p173) target = $region32
      $region31: #{tpu_custom_call.1} parent=5 // pred_region
        %s177 = ssub.s32 %s15, 1
        %s178 = sand.u32 %s42, 1
        %s179 = scalar_lea.sflag [#allocation5], %s178
        %s180 = sand.u32 %s42, 1
        %s181 = smul.addr %s180, 64
        %s182 = scalar_lea.vmem [#allocation4], %s181
        // Predicated region
        $region33: #{tpu_custom_call.1} parent=31 // pred_check
          %p183 = pneg %p55
        $region34: #{tpu_custom_call.1} parent=31 // pred_check_branch
          %185 = sbr.rel (%p183) target = $region36
        $region35: #{tpu_custom_call.1} parent=31 // pred_region
          %186 = dma.done %s179, 1024
        $region36: #{tpu_custom_call.1} parent=31 // pred_fallthru
          _
        %s187 = sand.u32 %s42, 1
        %s188 = scalar_lea.sflag [#allocation5], %s187
        %s189 = sand.u32 %s42, 1
        %s190 = smul.addr %s189, 64
        %s191 = scalar_lea.vmem [#allocation4], %s190
        %p192 = pneg %p55
        %p193 = pneg %p52
        %p194 = pneg %p76
        %p195 = pneg %p73
        %p196 = pneg %p97
        %p197 = pneg %p94
        %p198 = pneg %p123
        %p199 = pneg %p120
        %s200 = sand.u32 %s110, 1
        %s201 = scalar_lea.sflag [#allocation6], %s200
        %s202 = sand.u32 %s110, 1
        %s203 = scalar_lea.vmem [#allocation7], %s202
        %s204 = smul.u32 2, %s25
        %p205 = scmp.eq.s32.totalorder %s25, 0
        // Predicated region
        $region37: #{tpu_custom_call.1} parent=31 // pred_check
          %p206 = pneg %p205
        $region38: #{tpu_custom_call.1} parent=31 // pred_check_branch
          %208 = sbr.rel (%p206) target = $region40
        $region39: #{tpu_custom_call.1} parent=31 // pred_region
          %209 = vst [vmem:[#allocation2] sm:$0xff] 0.0
          %210 = vst [vmem:[#allocation2 + $0x8] sm:$0xff] 0.0
          %211 = vst [vmem:[#allocation2 + $0x10] sm:$0xff] 0.0
          %212 = vst [vmem:[#allocation2 + $0x18] sm:$0xff] 0.0
          %213 = vst [vmem:[#allocation2 + $0x20] sm:$0xff] 0.0
          %214 = vst [vmem:[#allocation2 + $0x28] sm:$0xff] 0.0
          %215 = vst [vmem:[#allocation2 + $0x30] sm:$0xff] 0.0
          %216 = vst [vmem:[#allocation2 + $0x38] sm:$0xff] 0.0
          %217 = vst [vmem:[#allocation3] sm:$0xff] -inf
          %218 = vst [vmem:[#allocation3 + $0x8] sm:$0xff] -inf
          %219 = vst [vmem:[#allocation3 + $0x10] sm:$0xff] -inf
          %220 = vst [vmem:[#allocation3 + $0x18] sm:$0xff] -inf
          %221 = vst [vmem:[#allocation3 + $0x20] sm:$0xff] -inf
          %222 = vst [vmem:[#allocation3 + $0x28] sm:$0xff] -inf
          %223 = vst [vmem:[#allocation3 + $0x30] sm:$0xff] -inf
          %224 = vst [vmem:[#allocation3 + $0x38] sm:$0xff] -inf
        $region40: #{tpu_custom_call.1} parent=31 // pred_fallthru
          _
        %v225 = vld [vmem:[%s182] sm:$0xff]
        %v226 = vld [vmem:[%s182 + $0x8] sm:$0xff]
        %v227 = vld [vmem:[%s182 + $0x10] sm:$0xff]
        %v228 = vld [vmem:[%s182 + $0x18] sm:$0xff]
        %v229 = vld [vmem:[%s182 + $0x20] sm:$0xff]
        %v230 = vld [vmem:[%s182 + $0x28] sm:$0xff]
        %v231 = vld [vmem:[%s182 + $0x30] sm:$0xff]
        %v232 = vld [vmem:[%s182 + $0x38] sm:$0xff]
        %v233 = vld [vmem:[#allocation2] sm:$0xff]
        %v234 = vld [vmem:[#allocation2 + $0x8] sm:$0xff]
        %v235 = vld [vmem:[#allocation2 + $0x10] sm:$0xff]
        %v236 = vld [vmem:[#allocation2 + $0x18] sm:$0xff]
        %v237 = vld [vmem:[#allocation2 + $0x20] sm:$0xff]
        %v238 = vld [vmem:[#allocation2 + $0x28] sm:$0xff]
        %v239 = vld [vmem:[#allocation2 + $0x30] sm:$0xff]
        %v240 = vld [vmem:[#allocation2 + $0x38] sm:$0xff]
        %v241 = vadd.f32 %v233, %v225
        %v242 = vadd.f32 %v234, %v226
        %v243 = vadd.f32 %v235, %v227
        %v244 = vadd.f32 %v236, %v228
        %v245 = vadd.f32 %v237, %v229
        %v246 = vadd.f32 %v238, %v230
        %v247 = vadd.f32 %v239, %v231
        %v248 = vadd.f32 %v240, %v232
        %249 = vst [vmem:[#allocation2] sm:$0xff] %v241
        %250 = vst [vmem:[#allocation2 + $0x8] sm:$0xff] %v242
        %251 = vst [vmem:[#allocation2 + $0x10] sm:$0xff] %v243
        %252 = vst [vmem:[#allocation2 + $0x18] sm:$0xff] %v244
        %253 = vst [vmem:[#allocation2 + $0x20] sm:$0xff] %v245
        %254 = vst [vmem:[#allocation2 + $0x28] sm:$0xff] %v246
        %255 = vst [vmem:[#allocation2 + $0x30] sm:$0xff] %v247
        %256 = vst [vmem:[#allocation2 + $0x38] sm:$0xff] %v248
        %v257 = vld [vmem:[#allocation3] sm:$0xff]
        %v258 = vld [vmem:[#allocation3 + $0x8] sm:$0xff]
        %v259 = vld [vmem:[#allocation3 + $0x10] sm:$0xff]
        %v260 = vld [vmem:[#allocation3 + $0x18] sm:$0xff]
        %v261 = vld [vmem:[#allocation3 + $0x20] sm:$0xff]
        %v262 = vld [vmem:[#allocation3 + $0x28] sm:$0xff]
        %v263 = vld [vmem:[#allocation3 + $0x30] sm:$0xff]
        %v264 = vld [vmem:[#allocation3 + $0x38] sm:$0xff]
        %v265 = vmax.f32 %v257, %v225
        %v266 = vmax.f32 %v258, %v226
        %v267 = vmax.f32 %v259, %v227
        %v268 = vmax.f32 %v260, %v228
        %v269 = vmax.f32 %v261, %v229
        %v270 = vmax.f32 %v262, %v230
        %v271 = vmax.f32 %v263, %v231
        %v272 = vmax.f32 %v264, %v232
        %273 = vst [vmem:[#allocation3] sm:$0xff] %v265
        %274 = vst [vmem:[#allocation3 + $0x8] sm:$0xff] %v266
        %275 = vst [vmem:[#allocation3 + $0x10] sm:$0xff] %v267
        %276 = vst [vmem:[#allocation3 + $0x18] sm:$0xff] %v268
        %277 = vst [vmem:[#allocation3 + $0x20] sm:$0xff] %v269
        %278 = vst [vmem:[#allocation3 + $0x28] sm:$0xff] %v270
        %279 = vst [vmem:[#allocation3 + $0x30] sm:$0xff] %v271
        %280 = vst [vmem:[#allocation3 + $0x38] sm:$0xff] %v272
        // Predicated region
        $region41: #{tpu_custom_call.1} parent=31 // pred_check
          %p281 = pneg %p205
        $region42: #{tpu_custom_call.1} parent=31 // pred_check_branch
          %283 = sbr.rel (%p281) target = $region44
        $region43: #{tpu_custom_call.1} parent=31 // pred_region
          %v284 = vld [vmem:[#allocation2] sm:$0xff]
          %v285 = vld [vmem:[#allocation2 + $0x8] sm:$0xff]
          %v286 = vld [vmem:[#allocation2 + $0x10] sm:$0xff]
          %v287 = vld [vmem:[#allocation2 + $0x18] sm:$0xff]
          %v288 = vld [vmem:[#allocation2 + $0x20] sm:$0xff]
          %v289 = vld [vmem:[#allocation2 + $0x28] sm:$0xff]
          %v290 = vld [vmem:[#allocation2 + $0x30] sm:$0xff]
          %v291 = vld [vmem:[#allocation2 + $0x38] sm:$0xff]
          %v292 = vadd.f32 %v284, %v285
          %293 = vadd.xlane.f32.xlu0 %v292
          %v294 = vpop.xlane.xlu0 %293
          %v295 = vadd.f32 %v286, %v287
          %296 = vadd.xlane.f32.xlu0 %v295
          %v297 = vpop.xlane.xlu0 %296
          %v298 = vadd.f32 %v288, %v289
          %299 = vadd.xlane.f32.xlu0 %v298
          %v300 = vpop.xlane.xlu0 %299
          %v301 = vadd.f32 %v290, %v291
          %302 = vadd.xlane.f32.xlu0 %v301
          %v303 = vpop.xlane.xlu0 %302
          %v304 = vmul.f32 %v294, 0.00390625
          %v305 = vmul.f32 %v297, 0.00390625
          %v306 = vmul.f32 %v300, 0.00390625
          %v307 = vmul.f32 %v303, 0.00390625
          %v308 = vld [vmem:[#allocation3] sm:$0xff]
          %v309 = vld [vmem:[#allocation3 + $0x8] sm:$0xff]
          %v310 = vld [vmem:[#allocation3 + $0x10] sm:$0xff]
          %v311 = vld [vmem:[#allocation3 + $0x18] sm:$0xff]
          %v312 = vld [vmem:[#allocation3 + $0x20] sm:$0xff]
          %v313 = vld [vmem:[#allocation3 + $0x28] sm:$0xff]
          %v314 = vld [vmem:[#allocation3 + $0x30] sm:$0xff]
          %v315 = vld [vmem:[#allocation3 + $0x38] sm:$0xff]
          %v316 = vmax.f32 %v308, %v309
          %317 = vmax.xlane.f32.xlu0 %v316
          %v318 = vpop.xlane.xlu0 %317
          %v319 = vmax.f32 %v310, %v311
          %320 = vmax.xlane.f32.xlu0 %v319
          %v321 = vpop.xlane.xlu0 %320
          %v322 = vmax.f32 %v312, %v313
          %323 = vmax.xlane.f32.xlu0 %v322
          %v324 = vpop.xlane.xlu0 %323
          %v325 = vmax.f32 %v314, %v315
          %326 = vmax.xlane.f32.xlu0 %v325
          %v327 = vpop.xlane.xlu0 %326
          %v332 = vlaneseq
          %v333 = vand.u32 %v332, 127
          %v334 = vlaneseq
          %v335 = vshrl.u32 %v334, 7
          %v336 = vsub.s32 %v333, %v335
          %v337 = vrot.slane %v304, %v336
          %v338 = vadd.s32 %v333, 4294967288
          %v339 = vlaneseq
          %v340 = vshrl.u32 %v339, 7
          %v341 = vsub.s32 %v338, %v340
          %v342 = vrot.slane %v305, %v341
          %vm343 = vcmask 130112
          %v344 = vsel %vm343, %v342, %v337
          %v345 = vadd.s32 %v333, 4294967280
          %v346 = vlaneseq
          %v347 = vshrl.u32 %v346, 7
          %v348 = vsub.s32 %v345, %v347
          %v349 = vrot.slane %v306, %v348
          %vm350 = vcmask 195712
          %v351 = vsel %vm350, %v349, %v344
          %v352 = vadd.s32 %v333, 4294967272
          %v353 = vlaneseq
          %v354 = vshrl.u32 %v353, 7
          %v355 = vsub.s32 %v352, %v354
          %v356 = vrot.slane %v307, %v355
          %vm357 = vcmask 261312
          %v358 = vsel %vm357, %v356, %v351
          %v364 = vlaneseq
          %v365 = vshrl.u32 %v364, 7
          %v366 = vsub.s32 %v333, %v365
          %v367 = vrot.slane %v318, %v366
          %v368 = vlaneseq
          %v369 = vshrl.u32 %v368, 7
          %v370 = vsub.s32 %v338, %v369
          %v371 = vrot.slane %v321, %v370
          %v372 = vsel %vm343, %v371, %v367
          %v373 = vlaneseq
          %v374 = vshrl.u32 %v373, 7
          %v375 = vsub.s32 %v345, %v374
          %v376 = vrot.slane %v324, %v375
          %v377 = vsel %vm350, %v376, %v372
          %v378 = vlaneseq
          %v379 = vshrl.u32 %v378, 7
          %v380 = vsub.s32 %v352, %v379
          %v381 = vrot.slane %v327, %v380
          %v382 = vsel %vm357, %v381, %v377
          %vm384 = vcmask 1040384
          %v385 = vsel %vm384, %v358, %v382
          %v386 = vld [vmem:[%s1] sm:$0xff]
          %v387 = vld [vmem:[%s1 + $0x8] sm:$0xff]
          %v388 = vld [vmem:[%s1 + $0x10] sm:$0xff]
          %v389 = vld [vmem:[%s1 + $0x18] sm:$0xff]
          %v390 = vld [vmem:[%s2] sm:$0x3]
          %v391 = vlaneseq
          %v392 = vshrl.u32 %v391, 7
          %v393 = vsub.s32 0, %v392
          %v394 = vrot.slane %v385, %v393
          %396 = vbcast.lane.b32.xlu0 %v394, 256
          %v397 = vpop.permute.xlu0 %396
          %s399 = sor.u32 256, 8
          %400 = vbcast.lane.b32.xlu0 %v394, %s399
          %v401 = vpop.permute.xlu0 %400
          %s403 = sor.u32 256, 16
          %404 = vbcast.lane.b32.xlu0 %v394, %s403
          %v405 = vpop.permute.xlu0 %404
          %s407 = sor.u32 256, 24
          %408 = vbcast.lane.b32.xlu0 %v394, %s407
          %v409 = vpop.permute.xlu0 %408
          %v410 = vlaneseq
          %v411 = vshrl.u32 %v410, 7
          %v412 = vsub.s32 1, %v411
          %v413 = vrot.slane %v385, %v412
          %415 = vbcast.lane.b32.xlu0 %v413, 256
          %v416 = vpop.permute.xlu0 %415
          %s418 = sor.u32 256, 8
          %419 = vbcast.lane.b32.xlu0 %v413, %s418
          %v420 = vpop.permute.xlu0 %419
          %s422 = sor.u32 256, 16
          %423 = vbcast.lane.b32.xlu0 %v413, %s422
          %v424 = vpop.permute.xlu0 %423
          %s426 = sor.u32 256, 24
          %427 = vbcast.lane.b32.xlu0 %v413, %s426
          %v428 = vpop.permute.xlu0 %427
          %v429 = vmul.f32 %v397, %v386
          %v430 = vmul.f32 %v401, %v387
          %v431 = vmul.f32 %v405, %v388
          %v432 = vmul.f32 %v409, %v389
          %v433 = vmul.f32 %v416, %v386
          %v434 = vmul.f32 %v420, %v387
          %v435 = vmul.f32 %v424, %v388
          %v436 = vmul.f32 %v428, %v389
          %vm437 = vcmask 15360
          %v438 = vsel %vm437, %v429, 0.0
          %v439 = vsel %vm437, %v430, 0.0
          %v440 = vadd.f32 %v438, %v439
          %v441 = vsel %vm437, %v431, 0.0
          %v442 = vadd.f32 %v440, %v441
          %v443 = vsel %vm437, %v432, 0.0
          %v444 = vadd.f32 %v442, %v443
          %v445 = vrot.slane %v444, 4
          %v446 = vadd.f32 %v444, %v445
          %v447 = vrot.slane %v446, 2
          %v448 = vadd.f32 %v446, %v447
          %v449 = vrot.slane %v448, 1
          %v450 = vadd.f32 %v448, %v449
          %v451 = vsel %vm437, %v433, 0.0
          %v452 = vsel %vm437, %v434, 0.0
          %v453 = vadd.f32 %v451, %v452
          %v454 = vsel %vm437, %v435, 0.0
          %v455 = vadd.f32 %v453, %v454
          %v456 = vsel %vm437, %v436, 0.0
          %v457 = vadd.f32 %v455, %v456
          %v458 = vrot.slane %v457, 4
          %v459 = vadd.f32 %v457, %v458
          %v460 = vrot.slane %v459, 2
          %v461 = vadd.f32 %v459, %v460
          %v462 = vrot.slane %v461, 1
          %v463 = vadd.f32 %v461, %v462
          %v464 = vmax.f32 %v450, 0.0
          %v465 = vmax.f32 %v463, 0.0
          %467 = vbcast.lane.b32.xlu0 %v464, 256
          %v468 = vpop.permute.xlu0 %467
          %470 = vbcast.lane.b32.xlu0 %v465, 256
          %v471 = vpop.permute.xlu0 %470
          %v472 = vmul.f32 %v468, %v390
          %v473 = vmul.f32 %v471, %v390
          %vm474 = vcmask 254976
          %v475 = vsel %vm474, %v472, 0.0
          %v476 = vrot.slane %v475, 4
          %v477 = vadd.f32 %v475, %v476
          %v478 = vrot.slane %v477, 2
          %v479 = vadd.f32 %v477, %v478
          %v480 = vrot.slane %v479, 1
          %v481 = vadd.f32 %v479, %v480
          %v482 = vsel %vm474, %v473, 0.0
          %v483 = vrot.slane %v482, 4
          %v484 = vadd.f32 %v482, %v483
          %v485 = vrot.slane %v484, 2
          %v486 = vadd.f32 %v484, %v485
          %v487 = vrot.slane %v486, 1
          %v488 = vadd.f32 %v486, %v487
          %v489 = vadd.f32 %v481, %v488
          %v490 = vxor.u32 %v489, 2147483648
          %v491 = vmul.f32 %v490, 1.442695
          %v492 = vpow.pop %v491
          %v493 = vadd.f32 %v492, 1.0
          %v494 = vrcp.pop %v493
          %v495 = vmul.f32 1.0, %v494
          %vm496 = vcmask 253952
          %497 = vst.msk [vmem:[%s203] sm:$0x1] %vm496, %v495
        $region44: #{tpu_custom_call.1} parent=31 // pred_fallthru
          _
        %s498 = sand.u32 %s110, 1
        %s499 = scalar_lea.sflag [#allocation6], %s498
        %s500 = sand.u32 %s110, 1
        %s501 = scalar_lea.vmem [#allocation7], %s500
        // Predicated region
        $region45: #{tpu_custom_call.1} parent=31 // pred_check
          %p502 = pneg %p120
        $region46: #{tpu_custom_call.1} parent=31 // pred_check_branch
          %504 = sbr.rel (%p502) target = $region48
        $region47: #{tpu_custom_call.1} parent=31 // pred_region
          %s506 = ssub.s32 16, 16
          %507 = vsyncadd %s499, %s506
          %s508 = smul.addr %s24, 16
          %s509 = scalar_lea.hbm %s3, %s508
          %s511 = sshll.u32 %s501, 4
          %s512 = int_to_ptr.vmem [resolvable:$true] %s511
          %514 = dma.vmem_to_hbm [thread:$0]  %s512, 16, %s509, %s499
        $region48: #{tpu_custom_call.1} parent=31 // pred_fallthru
          _
      $region32: #{tpu_custom_call.1} parent=5 // pred_fallthru
        _
      %p515 = scmp.le.s32.totalorder 2, %s15
      // Predicated region
      $region49: #{tpu_custom_call.1} parent=5 // pred_check
        %p516 = pneg %p515
      $region50: #{tpu_custom_call.1} parent=5 // pred_check_branch
        %518 = sbr.rel (%p516) target = $region52
      $region51: #{tpu_custom_call.1} parent=5 // pred_region
        %s519 = ssub.s32 %s15, 2
        // Predicated region
        $region53: #{tpu_custom_call.1} parent=51 // pred_check
          %p520 = pneg %p126
        $region54: #{tpu_custom_call.1} parent=51 // pred_check_branch
          %522 = sbr.rel (%p520) target = $region56
        $region55: #{tpu_custom_call.1} parent=51 // pred_region
          %s523 = sand.u32 %s111, 1
          %s524 = scalar_lea.sflag [#allocation6], %s523
          %s525 = sand.u32 %s111, 1
          %s526 = scalar_lea.vmem [#allocation7], %s525
          %527 = dma.done %s524, 16
        $region56: #{tpu_custom_call.1} parent=51 // pred_fallthru
          _
      $region52: #{tpu_custom_call.1} parent=5 // pred_fallthru
        _
    $region6: #{tpu_custom_call.1} parent=1 // loop_footer
      %s19 = sadd.s32 1, %s15
    $region7: #{tpu_custom_call.1} parent=1 // loop_footer_branch
      %14 = sbr.rel target = $region3
    $region8: #{tpu_custom_call.1} parent=1 // loop_exit
      _
    %528 = vsyncpa [#allocation5], 1
    %s529 = scalar_lea.sflag [#allocation5], 1
    %530 = vsyncpa %s529, 1
    %531 = vsyncpa [#allocation6], 1
    %s532 = scalar_lea.sflag [#allocation6], 1
    %533 = vsyncpa %s532, 1

</llo_original>
